<compile_context>
chip_gen: v7x
topology: tpu7x:2x2x1
jax: 0.10.0
libtpu: 0.0.40
codegen_flags: <defaults>
</compile_context>

<pallas_src>
import functools

import jax
import jax.numpy as jnp
from jax import lax
from jax.experimental import pallas as pl
from jax.experimental.pallas import tpu as pltpu

B = 2            # batch
L = 16           # sequence length ((L - K + 1) // P must equal 7 for Linear(7, 1))
C = 4            # in channels (DNA one-hot)
K = 3            # conv kernel size
P = 2            # pool size / stride
L_CONV = L - K + 1          # 14
L_POOL = L_CONV // P        # 7
OUT_LANES = 128             # lane-dense output slab width


def model_simple_kernel(x_ref, wt_ref, scalars_ref, o_ref):
    # x_ref:       (TB, L*C)      float32, VMEM   (channels-last flattened input block)
    # wt_ref:      (L*C, L_CONV)  float32, VMEM   (im2col Toeplitz conv weight)
    # scalars_ref: (2,)           float32, SMEM   [conv_bias, sum(lin_w)+lin_b]
    # o_ref:       (TB, 128)      float32, VMEM   (lane-dense output slab; col 0 is the result)
    x = x_ref[...]
    wt = wt_ref[...]
    bc = scalars_ref[0]
    wsum_bias = scalars_ref[1]

    # ---- Conv1d(4 -> 1, k=3), valid, stride 1: one MXU matmul via im2col weight ----
    conv = jnp.dot(x, wt, preferred_element_type=jnp.float32) + bc          # (TB, 14)

    # ---- MaxPool1d(2, 2) without reshape: pair-max via two static lane slices ----
    # pair_max[:, t] = max(conv[:, t], conv[:, t+1]); pool outputs are the even t's.
    pair_max = jnp.maximum(conv[:, : L_CONV - 1], conv[:, 1:L_CONV])        # (TB, 13)

    # ---- Softmax(dim=1) over a singleton channel + Linear(7 -> 1), folded ----
    # For finite pooled values softmax == 1 everywhere, so Linear(ones) = sum(W_lin) + b_lin.
    # Preserve NaN/Inf propagation of exp(p - p): (pair_max - pair_max) is 0 when finite,
    # NaN when +/-Inf or NaN; only pool (even) positions may contribute.
    lane = lax.broadcasted_iota(jnp.int32, pair_max.shape, 1)               # (TB, 13)
    nan_or_zero = jnp.where(lane % 2 == 0, pair_max - pair_max, 0.0)
    nan_term = jnp.sum(nan_or_zero, axis=-1, keepdims=True)                 # (TB, 1): 0 or NaN

    out = wsum_bias + nan_term                                              # (TB, 1)
    o_ref[...] = jnp.broadcast_to(out, o_ref.shape).astype(o_ref.dtype)


def _build_toeplitz(conv_w):
    """conv_w: (1, C, K) -> (L*C, L_CONV) with Wt[(t+k)*C + c, t] = conv_w[0, c, k]."""
    v = jnp.transpose(conv_w[0]).reshape(-1)                 # (K*C,), v[k*C + c] = w[c, k]
    r = jnp.arange(L * C)[:, None]                           # (64, 1)
    t = jnp.arange(L_CONV)[None, :]                          # (1, 14)
    j = r - t * C                                            # (64, 14)
    mask = (j >= 0) & (j < K * C)
    return jnp.where(mask, v[jnp.clip(j, 0, K * C - 1)], 0.0).astype(jnp.float32)


def _pick_batch_tile(b):
    """Largest power-of-two tile (<= 512) dividing b, else the whole batch as one block."""
    for tb in (512, 256, 128, 64, 32, 16, 8):
        if b % tb == 0:
            return tb
    return b


@functools.partial(jax.jit, static_argnames=())
def model_simple_forward(hello, conv_w, conv_b, lin_w, lin_b):
    """hello: (B, L, 4) any real dtype; returns (B,) float32 (matches .squeeze())."""
    # Host-side prep (fused by XLA, outside the kernel): lane-dense flatten + im2col weight
    # + folded softmax/linear scalar.
    # TODO(synk): for very large batches keep `hello` narrow in HBM (bf16/int8) and cast in-kernel.
    x_flat = hello.astype(jnp.float32).reshape(hello.shape[0], L * C)       # (B, 64)
    wt = _build_toeplitz(conv_w)                                            # (64, 14)
    scalars = jnp.stack([conv_b[0].astype(jnp.float32),
                         (jnp.sum(lin_w) + lin_b[0]).astype(jnp.float32)])  # (2,)

    b = x_flat.shape[0]
    tb = _pick_batch_tile(b)
    grid = (b // tb,)

    out_slab = pl.pallas_call(
        model_simple_kernel,
        out_shape=jax.ShapeDtypeStruct((b, OUT_LANES), jnp.float32),
        grid=grid,
        in_specs=[
            pl.BlockSpec((tb, L * C), lambda i: (i, 0)),                     # x block
            pl.BlockSpec((L * C, L_CONV), lambda i: (0, 0)),                 # Toeplitz weight
            pl.BlockSpec(memory_space=pltpu.MemorySpace.SMEM),               # scalars
        ],
        out_specs=pl.BlockSpec((tb, OUT_LANES), lambda i: (i, 0)),           # lane-dense slab
        compiler_params=pltpu.CompilerParams(dimension_semantics=("parallel",)),
    )(x_flat, wt, scalars)

    return out_slab[:, 0]                                                    # squeeze -> (B,)


def reference_forward(hello, conv_w, conv_b, lin_w, lin_b):
    """Pure-JAX reference mirroring the PyTorch module exactly."""
    x = jnp.transpose(hello.astype(jnp.float32), (0, 2, 1))                  # (B, 4, L)
    cols = [jnp.sum(x[:, :, t:t + K] * conv_w[0][None], axis=(1, 2))
            for t in range(L_CONV)]
    conv = jnp.stack(cols, axis=1) + conv_b[0]                               # (B, 14)
    pooled = jnp.max(conv.reshape(-1, L_POOL, P), axis=-1)                   # (B, 7)
    sm = jax.nn.softmax(pooled[:, None, :], axis=1)[:, 0, :]                 # softmax over channel dim
    out = sm @ lin_w[0] + lin_b[0]                                           # (B,)
    return out


if __name__ == "__main__":
    key = jax.random.PRNGKey(0)
    k_x, k_cw, k_cb, k_lw, k_lb = jax.random.split(key, 5)

    # Input (B, L, 4): "hello" DNA-like float input.
    hello = jax.random.normal(k_x, (B, L, C), dtype=jnp.float32)

    # Deterministic parameter init (same shapes as the PyTorch module, Kaiming-uniform style).
    s_conv = 1.0 / jnp.sqrt(C * K)
    conv_w = jax.random.uniform(k_cw, (1, C, K), jnp.float32, -s_conv, s_conv)
    conv_b = jax.random.uniform(k_cb, (1,), jnp.float32, -s_conv, s_conv)
    s_lin = 1.0 / jnp.sqrt(7.0)
    lin_w = jax.random.uniform(k_lw, (1, 7), jnp.float32, -s_lin, s_lin)
    lin_b = jax.random.uniform(k_lb, (1,), jnp.float32, -s_lin, s_lin)

    out = model_simple_forward(hello, conv_w, conv_b, lin_w, lin_b)
    out = jax.block_until_ready(out)

    ref = reference_forward(hello, conv_w, conv_b, lin_w, lin_b)
    assert out.shape == (B,), out.shape
    assert jnp.allclose(out, ref, atol=1e-5, rtol=1e-5), (out, ref)

    # TODO(synk): step() (loss computation over a loss_dict) is training glue, not ported.
    print("KERNEL_OK")
</pallas_src>

<mosaic_0001>
module attributes {stable_mosaic.version = 11 : i64} {
  func.func @model_simple_kernel(%arg0: i32, %arg1: memref<2x64xf32, #tpu.memory_space<vmem>>, %arg2: memref<64x14xf32, #tpu.memory_space<vmem>>, %arg3: memref<2xf32, #tpu.memory_space<smem>>, %arg4: memref<2x128xf32, #tpu.memory_space<vmem>>) attributes {dimension_semantics = [#tpu.dimension_semantics<parallel>], iteration_bounds = array<i64: 1>, scalar_prefetch = 0 : i64, scratch_operands = 0 : i64, tpu.core_type = #tpu.core_type<tc>, window_params = [{transform_indices = @transform_0, window_bounds = array<i64: 2, 64>}, {pipeline_mode = #tpu.pipeline_mode<synchronous>, transform_indices = @transform_1, window_bounds = array<i64: 64, 14>}, {transform_indices = @transform_2, window_bounds = array<i64: 2>}, {transform_indices = @transform_3, window_bounds = array<i64: 2, 128>}]} {
    %c0 = arith.constant 0 : index
    %c0_0 = arith.constant 0 : index
    %0 = vector.load %arg1[%c0, %c0_0] : memref<2x64xf32, #tpu.memory_space<vmem>>, vector<2x64xf32>
    %c0_1 = arith.constant 0 : index
    %c0_2 = arith.constant 0 : index
    %1 = vector.load %arg2[%c0_1, %c0_2] : memref<64x14xf32, #tpu.memory_space<vmem>>, vector<64x14xf32>
    %c0_3 = arith.constant 0 : index
    %2 = memref.load %arg3[%c0_3] : memref<2xf32, #tpu.memory_space<smem>>
    %c1 = arith.constant 1 : index
    %3 = memref.load %arg3[%c1] : memref<2xf32, #tpu.memory_space<smem>>
    %cst = arith.constant dense<0.000000e+00> : vector<2x14xf32>
    %4 = tpu.matmul %0, %1, %cst {dimension_numbers = #tpu.dot_dimension_numbers<[1], [0], [0], [1], [0, 0, 1, 1], [], []>} : vector<2x64xf32>, vector<64x14xf32>, vector<2x14xf32> -> vector<2x14xf32>
    %5 = vector.broadcast %2 : f32 to vector<2x14xf32>
    %6 = arith.addf %4, %5 : vector<2x14xf32>
    %7 = vector.extract_strided_slice %6 {offsets = [0, 0], sizes = [2, 13], strides = [1, 1]} : vector<2x14xf32> to vector<2x13xf32>
    %8 = vector.extract_strided_slice %6 {offsets = [0, 1], sizes = [2, 13], strides = [1, 1]} : vector<2x14xf32> to vector<2x13xf32>
    %9 = arith.maximumf %7, %8 : vector<2x13xf32>
    %10 = tpu.iota {dimensions = array<i32: 1>} : vector<2x13xi32>
    %c2_i32 = arith.constant 2 : i32
    %c0_i32 = arith.constant 0 : i32
    %11 = arith.cmpi eq, %c2_i32, %c0_i32 : i32
    %c1_i32 = arith.constant 1 : i32
    %12 = arith.select %11, %c1_i32, %c2_i32 : i32
    %13 = vector.broadcast %12 : i32 to vector<2x13xi32>
    %14 = arith.remsi %10, %13 : vector<2x13xi32>
    %c0_i32_4 = arith.constant 0 : i32
    %15 = vector.broadcast %c0_i32_4 : i32 to vector<2x13xi32>
    %16 = arith.cmpi ne, %14, %15 : vector<2x13xi32>
    %c0_i32_5 = arith.constant 0 : i32
    %17 = vector.broadcast %c0_i32_5 : i32 to vector<2x13xi32>
    %18 = arith.cmpi slt, %14, %17 : vector<2x13xi32>
    %c0_i32_6 = arith.constant 0 : i32
    %19 = arith.cmpi slt, %12, %c0_i32_6 : i32
    %20 = vector.broadcast %19 : i1 to vector<2x13xi1>
    %21 = vector.broadcast %20 : vector<2x13xi1> to vector<2x13xi1>
    %22 = arith.xori %18, %21 : vector<2x13xi1>
    %23 = arith.andi %22, %16 : vector<2x13xi1>
    %24 = vector.broadcast %12 : i32 to vector<2x13xi32>
    %25 = arith.addi %14, %24 : vector<2x13xi32>
    %26 = arith.select %23, %25, %14 : vector<2x13xi1>, vector<2x13xi32>
    %c0_i32_7 = arith.constant 0 : i32
    %27 = vector.broadcast %c0_i32_7 : i32 to vector<2x13xi32>
    %28 = arith.cmpi eq, %26, %27 : vector<2x13xi32>
    %29 = arith.subf %9, %9 : vector<2x13xf32>
    %cst_8 = arith.constant 0.000000e+00 : f32
    %30 = vector.broadcast %cst_8 : f32 to vector<2x13xf32>
    %31 = arith.select %28, %29, %30 : vector<2x13xi1>, vector<2x13xf32>
    %cst_9 = arith.constant dense<0.000000e+00> : vector<2xf32>
    %32 = vector.multi_reduction <add>, %31, %cst_9 [1] : vector<2x13xf32> to vector<2xf32>
    %33 = vector.shape_cast %32 : vector<2xf32> to vector<2x1xf32>
    %34 = vector.broadcast %3 : f32 to vector<2x1xf32>
    %35 = arith.addf %34, %33 : vector<2x1xf32>
    %36 = vector.shape_cast %35 : vector<2x1xf32> to vector<2x1xf32>
    %37 = vector.broadcast %36 : vector<2x1xf32> to vector<2x128xf32>
    %c0_10 = arith.constant 0 : index
    %c0_11 = arith.constant 0 : index
    %38 = vector.load %arg4[%c0_10, %c0_11] : memref<2x128xf32, #tpu.memory_space<vmem>>, vector<2x128xf32>
    tpu.vector_store %arg4[%c0_10, %c0_11], %37 {strides = array<i32>} : memref<2x128xf32, #tpu.memory_space<vmem>>, vector<2x128xf32>,
    return
  }
  func.func @transform_0(%arg0: i32) -> (i32, i32) {
    %c0_i32 = arith.constant 0 : i32
    %c0_i32_0 = arith.constant 0 : i32
    return %arg0, %c0_i32 : i32, i32
  }
  func.func @transform_1(%arg0: i32) -> (i32, i32) {
    %c0_i32 = arith.constant 0 : i32
    %c0_i32_0 = arith.constant 0 : i32
    %c0_i32_1 = arith.constant 0 : i32
    return %c0_i32, %c0_i32_0 : i32, i32
  }
  func.func @transform_2(%arg0: i32) -> i32 {
    %c0_i32 = arith.constant 0 : i32
    %c0_i32_0 = arith.constant 0 : i32
    return %c0_i32 : i32
  }
  func.func @transform_3(%arg0: i32) -> (i32, i32) {
    %c0_i32 = arith.constant 0 : i32
    %c0_i32_0 = arith.constant 0 : i32
    return %arg0, %c0_i32 : i32, i32
  }
}

</mosaic_0001>

<llo_original>
// kernel: model_simple_forward.1
$region0: #{model_simple_forward.1}
  #allocation0 [shape = 'u32[]', space=smem, size = 0x4, offset = 0x4, fixed_abs, tag = 'smem constant byte address 0x4 - core index']
  #allocation1 [shape = 'u32[144,128]{1,0:T(1,128)}', space=vmem, size = 0x12000, scoped, tag = 'internal scratch']
  %s0 = inlined_call_operand.vmem [shape: f32[2,64], index: 0, kind: input, shape index: {}]
  %s1 = inlined_call_operand.vmem [shape: f32[64,14], index: 1, kind: input, shape index: {}]
  %s2 = inlined_call_operand.vmem [shape: f32[2], index: 2, kind: input, shape index: {}]
  %s3 = inlined_call_operand.vmem [shape: f32[2,128], index: 3, kind: output, shape index: {}]
  %s4 = sld [smem:[#allocation0]]
  $region26: #{model_simple_forward.1} parent=0
    _
  %s6 = ssub.s32 1, %s4
  %s7 = scalar_select 0, %s6, %s4
  $region1: #{model_simple_forward.1} parent=0
    #allocation2 [shape = 'u8[512]{0}', space=smem, size = 0x200, scoped, tag = 'input window, operand 2, single buffered']
    #allocation3 [shape = 's32[1]{0}', space=sflag, size = 0x4, scoped, tag = 'scoped memory for model_simple_forward.1']
    %8 = vsyncpa [#allocation3], 0
    // Predicated region
    $region2: #{model_simple_forward.1} parent=1 // pred_check
      _
    $region3: #{model_simple_forward.1} parent=1 // pred_check_branch
      %10 = sbr.rel (0) target = $region5
    $region4: #{model_simple_forward.1} parent=1 // pred_region
      _
    $region5: #{model_simple_forward.1} parent=1 // pred_fallthru
      _
    // Predicated region
    $region6: #{model_simple_forward.1} parent=1 // pred_check
      _
    $region7: #{model_simple_forward.1} parent=1 // pred_check_branch
      %12 = sbr.rel (0) target = $region9
    $region8: #{model_simple_forward.1} parent=1 // pred_region
      _
    $region9: #{model_simple_forward.1} parent=1 // pred_fallthru
      _
    // Predicated region
    $region10: #{model_simple_forward.1} parent=1 // pred_check
      _
    $region11: #{model_simple_forward.1} parent=1 // pred_check_branch
      %14 = sbr.rel (0) target = $region13
    $region12: #{model_simple_forward.1} parent=1 // pred_region
      %s16 = ssub.s32 16, 16
      %17 = vsyncadd [#allocation3], %s16
      %s19 = sshll.u32 %s2, 4
      %s20 = int_to_ptr.vmem [resolvable:$true] %s19
      %22 = dma.vmem_to_smem %s20, 16, [#allocation2], [#allocation3]
    $region13: #{model_simple_forward.1} parent=1 // pred_fallthru
      _
    // Predicated region
    $region14: #{model_simple_forward.1} parent=1 // pred_check
      _
    $region15: #{model_simple_forward.1} parent=1 // pred_check_branch
      %24 = sbr.rel (0) target = $region17
    $region16: #{model_simple_forward.1} parent=1 // pred_region
      %25 = dma.done [#allocation3], 16
    $region17: #{model_simple_forward.1} parent=1 // pred_fallthru
      _
    %26 = sfence
    %v27 = vld [vmem:[%s0] sm:$0x3]
    %v28 = vld [vmem:[%s1] sm:$0xff]
    %v29 = vld [vmem:[%s1 + $0x8] sm:$0xff]
    %v30 = vld [vmem:[%s1 + $0x10] sm:$0xff]
    %v31 = vld [vmem:[%s1 + $0x18] sm:$0xff]
    %v32 = vld [vmem:[%s1 + $0x20] sm:$0xff]
    %v33 = vld [vmem:[%s1 + $0x28] sm:$0xff]
    %v34 = vld [vmem:[%s1 + $0x30] sm:$0xff]
    %v35 = vld [vmem:[%s1 + $0x38] sm:$0xff]
    %s36 = sld [smem:[#allocation2]]
    %s37 = sld [smem:[#allocation2 + $0x1]]
    %v38 = vstv %s36
    %vm39 = vcmask 523264
    %v41 = vsel %vm39, %v27, 0
    %43 = vmatprep.subr.mxu0 0.0
    %44 = vmatpush1.msra.mxu0 %v28
    %45 = vmatprep.subr.mxu0 0.0
    %46 = vmatpush1.msra.mxu0 %v29
    %47 = vmatprep.subr.mxu0 0.0
    %48 = vmatpush1.msra.mxu0 %v30
    %49 = vmatprep.subr.mxu0 0.0
    %50 = vmatpush1.msra.mxu0 %v31
    %51 = vmatprep.subr.mxu0 0.0
    %52 = vmatpush1.msra.mxu0 %v32
    %53 = vmatprep.subr.mxu0 0.0
    %54 = vmatpush1.msra.mxu0 %v33
    %55 = vmatprep.subr.mxu0 0.0
    %56 = vmatpush1.msra.mxu0 %v34
    %57 = vmatprep.subr.mxu0 0.0
    %58 = vmatpush1.msra.mxu0 %v35
    %59 = vmatprep.subr.mxu0 0.0
    %60 = vmatpush1.msra.mxu0 0.0
    %61 = vmatprep.subr.mxu0 0.0
    %62 = vmatpush1.msra.mxu0 0.0
    %63 = vmatprep.subr.mxu0 0.0
    %64 = vmatpush1.msra.mxu0 0.0
    %65 = vmatprep.subr.mxu0 0.0
    %66 = vmatpush1.msra.mxu0 0.0
    %67 = vmatprep.subr.mxu0 0.0
    %68 = vmatpush1.msra.mxu0 0.0
    %69 = vmatprep.subr.mxu0 0.0
    %70 = vmatpush1.msra.mxu0 0.0
    %71 = vmatprep.subr.mxu0 0.0
    %72 = vmatpush1.msra.mxu0 0.0
    %73 = vmatprep.subr.mxu0 0.0
    %74 = vmatpush1.msra.mxu0 0.0
    %75 = vmatprep.subr.mxu0 0.0
    %76 = vmatpush1.msra.mxu0 0.0
    %77 = vmatprep.subr.mxu0 0.0
    %78 = vmatpush1.msra.mxu0 0.0
    %79 = vmatprep.subr.mxu0 0.0
    %80 = vmatpush1.msra.mxu0 0.0
    %81 = vmatprep.subr.mxu0 0.0
    %82 = vmatpush1.msra.mxu0 0.0
    %83 = vmatprep.subr.mxu0 0.0
    %84 = vmatpush1.msra.mxu0 0.0
    %85 = vmatprep.subr.mxu0 0.0
    %86 = vmatpush1.msra.mxu0 0.0
    %87 = vmatprep.subr.mxu0 0.0
    %88 = vmatpush1.msra.mxu0 0.0
    %89 = vmatprep.subr.mxu0 0.0
    %90 = vmatpush1.msra.mxu0 0.0
    %91 = vmatprep.subr.mxu0 0.0
    %92 = vmatpush1.msra.mxu0 0.0
    %93 = vmatprep.subr.mxu0 0.0
    %94 = vmatpush1.msra.mxu0 0.0
    %95 = vmatprep.subr.mxu0 0.0
    %96 = vmatpush1.msra.mxu0 0.0
    %97 = vmatprep.subr.mxu0 0.0
    %98 = vmatpush1.msra.mxu0 0.0
    %99 = vmatprep.subr.mxu0 0.0
    %100 = vmatpush1.msra.mxu0 0.0
    %101 = vmatprep.subr.mxu0 0.0
    %102 = vmatpush1.msra.mxu0 0.0
    %103 = vmatprep.subr.mxu0 0.0
    %104 = vmatpush1.msra.mxu0 0.0
    %105 = vmatprep.subr.mxu0 0.0
    %106 = vmatpush1.msra.mxu0 0.0
    %107 = vmatprep.mubr.f32.mxu0 0.0
    %108 = vmatmul.mubr.f32.gmra.mrb[0].mxu0 %v41
    %v109 = vpop.f32.mrb[0].mxu0
    %v110 = vadd.f32 %v38, %v109
    %v111 = vpop.f32.mrb[0].mxu0
    %112 = vdwg.mxu0
    %114 = vrot.lane.b32.xlu0 %v110, 127
    %v115 = vpop.permute.xlu0 %114
    %v117 = vmax.f32 %v110, %v115
    %v118 = vlaneseq
    %v119 = vand.u32 %v118, 127
    %vm120 = vcmp.lt.s32.totalorder %v119, 0
    %v121 = vsub.s32 0, %v119
    %v122 = vsel %vm120, %v121, %v119
    %v123 = vshrl.u32 %v122, 1
    %v124 = vand.u32 %v122, 1
    %v125 = vsub.s32 0, %v124
    %v126 = vsel %vm120, %v125, %v124
    %vm127 = vcmp.ne.s32.totalorder %v126, 0
    %vm128 = vcmp.lt.s32.totalorder %v126, 0
    %vm129 = vmand %vm128, %vm127
    %v130 = vadd.s32 %v126, 2
    %v131 = vsel %vm129, %v130, %v126
    %vm132 = vcmp.eq.s32.totalorder %v131, 0
    %v133 = vsub.f32 %v117, %v117
    %v134 = vsel %vm132, %v133, 0.0
    %vm135 = vcmask 99328
    %v136 = vsel %vm135, %v134, 0.0
    %137 = vadd.xlane.f32.xlu0 %v136
    %v138 = vpop.xlane.xlu0 %137
    %v139 = vstv %s37
    %v140 = vadd.f32 %v139, %v138
    %141 = vst [vmem:[%s3] sm:$0x3] %v140
    // Predicated region
    $region18: #{model_simple_forward.1} parent=1 // pred_check
      _
    $region19: #{model_simple_forward.1} parent=1 // pred_check_branch
      %143 = sbr.rel (0) target = $region21
    $region20: #{model_simple_forward.1} parent=1 // pred_region
      _
    $region21: #{model_simple_forward.1} parent=1 // pred_fallthru
      _
    // Predicated region
    $region22: #{model_simple_forward.1} parent=1 // pred_check
      _
    $region23: #{model_simple_forward.1} parent=1 // pred_check_branch
      %145 = sbr.rel (0) target = $region25
    $region24: #{model_simple_forward.1} parent=1 // pred_region
      _
    $region25: #{model_simple_forward.1} parent=1 // pred_fallthru
      _
    %146 = vsyncpa [#allocation3], 1

</llo_original>
